<compile_context>
chip_gen: v5e
topology: v5e:2x2
jax: 0.10.0
libtpu: 0.0.40
codegen_flags: <defaults>
</compile_context>

<pallas_src>
import jax
import jax.numpy as jnp
from jax import lax
from jax.experimental import pallas as pl
from jax.experimental.pallas import tpu as pltpu

NUM_LAYERS = 12          # BERT-base: 12 encoder layers
DEFAULT_TILE_BS = 1024   # requested row tile; capped by VMEM capacity below


def _vmem_capacity_bytes():
    """Best-effort VMEM capacity query; conservative fallback (v7x per-TC)."""
    try:
        info = pltpu.get_tpu_info()
        for attr in ("vmem_capacity_bytes", "vmem_bytes", "vmem_size_bytes"):
            v = getattr(info, attr, None)
            if v:
                return int(v)
    except Exception:
        pass
    return 64 << 20


def _make_weighted_sum_kernel(num_layers, strip, num_strips):
    def kernel(w_ref, x_ref, o_ref):
        """One grid step = one row tile, strip-mined over rows.

        w_ref: SMEM (L,)            gamma-folded per-layer scalar weights
        x_ref: VMEM (L, TILE_BS, H) all encoder layers for this row tile
        o_ref: VMEM (TILE_BS, H)    output tile
        """
        def body(s, carry):
            r = pl.multiple_of(s * strip, strip)
            # Static unroll over the 12 layers; acc is only (strip, H) f32,
            # so it lives in vregs (no VMEM spill / vst pressure).
            acc = w_ref[0] * x_ref[0, pl.ds(r, strip), :].astype(jnp.float32)
            for l in range(1, num_layers):
                acc = acc + (
                    w_ref[l] * x_ref[l, pl.ds(r, strip), :].astype(jnp.float32)
                )
            o_ref[pl.ds(r, strip), :] = acc.astype(o_ref.dtype)
            return carry

        lax.fori_loop(0, num_strips, body, 0)

    return kernel


def bert_embedder_weighted(encoded_layers, bert_weights, bert_gamma,
                           *, tile_bs=DEFAULT_TILE_BS):
    """encoded_layers: (L, B, S, H); bert_weights: (L, 1); bert_gamma: (1, 1).

    Returns gamma * sum_l(weights[l] * encoded_layers[l]) -> (B, S, H),
    matching the 'weighted' branch of BERTEmbedder.forward.

    encoded_layers may be f32 or bf16 (bf16 recommended: halves HBM traffic;
    accumulation is always f32 in-kernel).
    """
    L, B, S, H = encoded_layers.shape
    assert L == NUM_LAYERS
    BS = B * S
    x = encoded_layers.reshape(L, BS, H)
    itemsize = jnp.dtype(encoded_layers.dtype).itemsize

    # Fold gamma into the per-layer weights (exact): gamma*sum(w*x)=sum((g*w)*x)
    w = (bert_gamma.reshape(()) * bert_weights.reshape(L)).astype(jnp.float32)

    # ---- row-strip size: keep the f32 accumulator in vregs (~<=16 vregs) ----
    sub = 16 if itemsize == 2 else 8                 # sublane packing granularity
    strip = max(sub, min(64, ((16 * 1024) // max(H, 1)) // sub * sub))
    bs_rounded = ((BS + sub - 1) // sub) * sub
    req = max(sub, (int(tile_bs) // sub) * sub)      # sanitize user tile
    strip = max(sub, min(strip, bs_rounded, req))

    # ---- per-generation tile sizing from VMEM capacity ----
    vmem_cap = _vmem_capacity_bytes()
    budget = int(min(vmem_cap, 128 << 20) * 0.6)     # headroom for scratch etc.
    per_row = 2 * (L + 1) * H * itemsize             # double-buffered in + out
    tile_cap = max(strip, (budget // per_row) // strip * strip)

    tile_bs = max(strip, (req // strip) * strip)
    tile_bs = min(tile_bs, tile_cap)
    tile_bs = min(tile_bs, ((BS + strip - 1) // strip) * strip)
    num_tiles = pl.cdiv(BS, tile_bs)                 # ragged last block is fine
    num_strips = tile_bs // strip

    needed = 2 * (L + 1) * tile_bs * H * itemsize
    vmem_limit = min(int(vmem_cap * 0.9), max(needed + (4 << 20), 32 << 20))

    kernel = _make_weighted_sum_kernel(L, strip, num_strips)

    cost = pl.CostEstimate(
        flops=2 * L * BS * H,
        transcendentals=0,
        bytes_accessed=(L * BS * H + BS * H) * itemsize,
    )

    out = pl.pallas_call(
        kernel,
        out_shape=jax.ShapeDtypeStruct((BS, H), encoded_layers.dtype),
        grid_spec=pltpu.PrefetchScalarGridSpec(
            num_scalar_prefetch=0,
            grid=(num_tiles,),
            in_specs=[
                pl.BlockSpec(memory_space=pltpu.MemorySpace.SMEM),   # weights
                pl.BlockSpec((L, tile_bs, H), lambda i: (0, i, 0)),  # layers
            ],
            out_specs=pl.BlockSpec((tile_bs, H), lambda i: (i, 0)),
        ),
        compiler_params=pltpu.CompilerParams(
            # Row tiles are independent -> shard across v7x's 2 TensorCores.
            # (For best v7x balance feed an even number of tiles; with
            # capacity-driven tiles real BERT workloads give many tiles.)
            dimension_semantics=("parallel",),
            vmem_limit_bytes=vmem_limit,
        ),
        cost_estimate=cost,
    )(w, x)

    return out.reshape(B, S, H)


def init_params(key):
    """Deterministic xavier_normal init matching BERTEmbedder.init_weights."""
    kw, kg = jax.random.split(key)
    # bert_weights: (12, 1) -> fan_in=1, fan_out=12, std = sqrt(2/(1+12))
    std_w = (2.0 / (1 + NUM_LAYERS)) ** 0.5
    bert_weights = std_w * jax.random.normal(kw, (NUM_LAYERS, 1), jnp.float32)
    # bert_gamma: (1, 1) -> fan_in=1, fan_out=1, std = 1.0
    bert_gamma = 1.0 * jax.random.normal(kg, (1, 1), jnp.float32)
    return bert_weights, bert_gamma


def _reference(encoded_layers, bert_weights, bert_gamma):
    L = encoded_layers.shape[0]
    return (bert_gamma.reshape(()) * jnp.sum(
        encoded_layers.astype(jnp.float32)
        * bert_weights.reshape(L, 1, 1, 1), axis=0
    )).astype(encoded_layers.dtype)


if __name__ == "__main__":
    # TODO(synk): the BertModel encoder itself (external pretrained
    # transformer) is not reproduced here; its 12 output layers are
    # synthesized as inputs.
    key = jax.random.PRNGKey(0)
    k_params, k1, k2, k3 = jax.random.split(key, 4)

    bert_weights, bert_gamma = init_params(k_params)

    # --- small shape consistent with the module (batch=2, seq=8, hidden=32) ---
    B, S, H = 2, 8, 32
    enc1 = jax.random.normal(k1, (NUM_LAYERS, B, S, H), jnp.float32)
    out1 = jax.block_until_ready(bert_embedder_weighted(enc1, bert_weights, bert_gamma))
    ref1 = _reference(enc1, bert_weights, bert_gamma)
    assert out1.shape == (B, S, H)
    assert jnp.allclose(out1, ref1, atol=1e-5, rtol=1e-5)

    # --- ragged-grid path: BS=80 with tile_bs=64 -> 2 tiles, last one partial ---
    B2, S2, H2 = 2, 40, 128
    enc2 = jax.random.normal(k2, (NUM_LAYERS, B2, S2, H2), jnp.float32)
    out2 = jax.block_until_ready(
        bert_embedder_weighted(enc2, bert_weights, bert_gamma, tile_bs=64)
    )
    ref2 = _reference(enc2, bert_weights, bert_gamma)
    assert out2.shape == (B2, S2, H2)
    assert jnp.allclose(out2, ref2, atol=1e-5, rtol=1e-5)

    # --- bf16 activations (recommended caller contract: halves HBM traffic) ---
    B3, S3, H3 = 2, 24, 128
    enc3 = jax.random.normal(
        k3, (NUM_LAYERS, B3, S3, H3), jnp.float32
    ).astype(jnp.bfloat16)
    out3 = jax.block_until_ready(bert_embedder_weighted(enc3, bert_weights, bert_gamma))
    ref3 = _reference(enc3, bert_weights, bert_gamma)
    assert out3.shape == (B3, S3, H3)
    assert jnp.allclose(out3.astype(jnp.float32), ref3.astype(jnp.float32),
                        atol=5e-2, rtol=5e-2)

    print("KERNEL_OK")
</pallas_src>

<mosaic_0001>
module attributes {stable_mosaic.version = 11 : i64} {
  func.func @kernel(%arg0: i32, %arg1: memref<12xf32, #tpu.memory_space<smem>>, %arg2: memref<12x16x32xf32, #tpu.memory_space<vmem>>, %arg3: memref<16x32xf32, #tpu.memory_space<vmem>>) attributes {dimension_semantics = [#tpu.dimension_semantics<parallel>], iteration_bounds = array<i64: 1>, scalar_prefetch = 0 : i64, scratch_operands = 0 : i64, tpu.core_type = #tpu.core_type<tc>, window_params = [{transform_indices = @transform_0, window_bounds = array<i64: 12>}, {transform_indices = @transform_1, window_bounds = array<i64: 12, 16, 32>}, {transform_indices = @transform_2, window_bounds = array<i64: 16, 32>}]} {
    %c0_i32 = arith.constant 0 : i32
    %c16_i32 = arith.constant 16 : i32
    %0 = arith.muli %c0_i32, %c16_i32 : i32
    %1 = tpu.assume_multiple %0, 16 : i32
    %c0 = arith.constant 0 : index
    %2 = memref.load %arg1[%c0] : memref<12xf32, #tpu.memory_space<smem>>
    %c0_0 = arith.constant 0 : index
    %3 = arith.index_cast %1 : i32 to index
    %c0_1 = arith.constant 0 : index
    %4 = vector.load %arg2[%c0_0, %3, %c0_1] : memref<12x16x32xf32, #tpu.memory_space<vmem>>, vector<1x16x32xf32>
    %5 = vector.shape_cast %4 : vector<1x16x32xf32> to vector<16x32xf32>
    %6 = vector.broadcast %2 : f32 to vector<16x32xf32>
    %7 = arith.mulf %6, %5 : vector<16x32xf32>
    %c1 = arith.constant 1 : index
    %8 = memref.load %arg1[%c1] : memref<12xf32, #tpu.memory_space<smem>>
    %c1_2 = arith.constant 1 : index
    %9 = arith.index_cast %1 : i32 to index
    %c0_3 = arith.constant 0 : index
    %10 = vector.load %arg2[%c1_2, %9, %c0_3] : memref<12x16x32xf32, #tpu.memory_space<vmem>>, vector<1x16x32xf32>
    %11 = vector.shape_cast %10 : vector<1x16x32xf32> to vector<16x32xf32>
    %12 = vector.broadcast %8 : f32 to vector<16x32xf32>
    %13 = arith.mulf %12, %11 : vector<16x32xf32>
    %14 = arith.addf %7, %13 : vector<16x32xf32>
    %c2 = arith.constant 2 : index
    %15 = memref.load %arg1[%c2] : memref<12xf32, #tpu.memory_space<smem>>
    %c2_4 = arith.constant 2 : index
    %16 = arith.index_cast %1 : i32 to index
    %c0_5 = arith.constant 0 : index
    %17 = vector.load %arg2[%c2_4, %16, %c0_5] : memref<12x16x32xf32, #tpu.memory_space<vmem>>, vector<1x16x32xf32>
    %18 = vector.shape_cast %17 : vector<1x16x32xf32> to vector<16x32xf32>
    %19 = vector.broadcast %15 : f32 to vector<16x32xf32>
    %20 = arith.mulf %19, %18 : vector<16x32xf32>
    %21 = arith.addf %14, %20 : vector<16x32xf32>
    %c3 = arith.constant 3 : index
    %22 = memref.load %arg1[%c3] : memref<12xf32, #tpu.memory_space<smem>>
    %c3_6 = arith.constant 3 : index
    %23 = arith.index_cast %1 : i32 to index
    %c0_7 = arith.constant 0 : index
    %24 = vector.load %arg2[%c3_6, %23, %c0_7] : memref<12x16x32xf32, #tpu.memory_space<vmem>>, vector<1x16x32xf32>
    %25 = vector.shape_cast %24 : vector<1x16x32xf32> to vector<16x32xf32>
    %26 = vector.broadcast %22 : f32 to vector<16x32xf32>
    %27 = arith.mulf %26, %25 : vector<16x32xf32>
    %28 = arith.addf %21, %27 : vector<16x32xf32>
    %c4 = arith.constant 4 : index
    %29 = memref.load %arg1[%c4] : memref<12xf32, #tpu.memory_space<smem>>
    %c4_8 = arith.constant 4 : index
    %30 = arith.index_cast %1 : i32 to index
    %c0_9 = arith.constant 0 : index
    %31 = vector.load %arg2[%c4_8, %30, %c0_9] : memref<12x16x32xf32, #tpu.memory_space<vmem>>, vector<1x16x32xf32>
    %32 = vector.shape_cast %31 : vector<1x16x32xf32> to vector<16x32xf32>
    %33 = vector.broadcast %29 : f32 to vector<16x32xf32>
    %34 = arith.mulf %33, %32 : vector<16x32xf32>
    %35 = arith.addf %28, %34 : vector<16x32xf32>
    %c5 = arith.constant 5 : index
    %36 = memref.load %arg1[%c5] : memref<12xf32, #tpu.memory_space<smem>>
    %c5_10 = arith.constant 5 : index
    %37 = arith.index_cast %1 : i32 to index
    %c0_11 = arith.constant 0 : index
    %38 = vector.load %arg2[%c5_10, %37, %c0_11] : memref<12x16x32xf32, #tpu.memory_space<vmem>>, vector<1x16x32xf32>
    %39 = vector.shape_cast %38 : vector<1x16x32xf32> to vector<16x32xf32>
    %40 = vector.broadcast %36 : f32 to vector<16x32xf32>
    %41 = arith.mulf %40, %39 : vector<16x32xf32>
    %42 = arith.addf %35, %41 : vector<16x32xf32>
    %c6 = arith.constant 6 : index
    %43 = memref.load %arg1[%c6] : memref<12xf32, #tpu.memory_space<smem>>
    %c6_12 = arith.constant 6 : index
    %44 = arith.index_cast %1 : i32 to index
    %c0_13 = arith.constant 0 : index
    %45 = vector.load %arg2[%c6_12, %44, %c0_13] : memref<12x16x32xf32, #tpu.memory_space<vmem>>, vector<1x16x32xf32>
    %46 = vector.shape_cast %45 : vector<1x16x32xf32> to vector<16x32xf32>
    %47 = vector.broadcast %43 : f32 to vector<16x32xf32>
    %48 = arith.mulf %47, %46 : vector<16x32xf32>
    %49 = arith.addf %42, %48 : vector<16x32xf32>
    %c7 = arith.constant 7 : index
    %50 = memref.load %arg1[%c7] : memref<12xf32, #tpu.memory_space<smem>>
    %c7_14 = arith.constant 7 : index
    %51 = arith.index_cast %1 : i32 to index
    %c0_15 = arith.constant 0 : index
    %52 = vector.load %arg2[%c7_14, %51, %c0_15] : memref<12x16x32xf32, #tpu.memory_space<vmem>>, vector<1x16x32xf32>
    %53 = vector.shape_cast %52 : vector<1x16x32xf32> to vector<16x32xf32>
    %54 = vector.broadcast %50 : f32 to vector<16x32xf32>
    %55 = arith.mulf %54, %53 : vector<16x32xf32>
    %56 = arith.addf %49, %55 : vector<16x32xf32>
    %c8 = arith.constant 8 : index
    %57 = memref.load %arg1[%c8] : memref<12xf32, #tpu.memory_space<smem>>
    %c8_16 = arith.constant 8 : index
    %58 = arith.index_cast %1 : i32 to index
    %c0_17 = arith.constant 0 : index
    %59 = vector.load %arg2[%c8_16, %58, %c0_17] : memref<12x16x32xf32, #tpu.memory_space<vmem>>, vector<1x16x32xf32>
    %60 = vector.shape_cast %59 : vector<1x16x32xf32> to vector<16x32xf32>
    %61 = vector.broadcast %57 : f32 to vector<16x32xf32>
    %62 = arith.mulf %61, %60 : vector<16x32xf32>
    %63 = arith.addf %56, %62 : vector<16x32xf32>
    %c9 = arith.constant 9 : index
    %64 = memref.load %arg1[%c9] : memref<12xf32, #tpu.memory_space<smem>>
    %c9_18 = arith.constant 9 : index
    %65 = arith.index_cast %1 : i32 to index
    %c0_19 = arith.constant 0 : index
    %66 = vector.load %arg2[%c9_18, %65, %c0_19] : memref<12x16x32xf32, #tpu.memory_space<vmem>>, vector<1x16x32xf32>
    %67 = vector.shape_cast %66 : vector<1x16x32xf32> to vector<16x32xf32>
    %68 = vector.broadcast %64 : f32 to vector<16x32xf32>
    %69 = arith.mulf %68, %67 : vector<16x32xf32>
    %70 = arith.addf %63, %69 : vector<16x32xf32>
    %c10 = arith.constant 10 : index
    %71 = memref.load %arg1[%c10] : memref<12xf32, #tpu.memory_space<smem>>
    %c10_20 = arith.constant 10 : index
    %72 = arith.index_cast %1 : i32 to index
    %c0_21 = arith.constant 0 : index
    %73 = vector.load %arg2[%c10_20, %72, %c0_21] : memref<12x16x32xf32, #tpu.memory_space<vmem>>, vector<1x16x32xf32>
    %74 = vector.shape_cast %73 : vector<1x16x32xf32> to vector<16x32xf32>
    %75 = vector.broadcast %71 : f32 to vector<16x32xf32>
    %76 = arith.mulf %75, %74 : vector<16x32xf32>
    %77 = arith.addf %70, %76 : vector<16x32xf32>
    %c11 = arith.constant 11 : index
    %78 = memref.load %arg1[%c11] : memref<12xf32, #tpu.memory_space<smem>>
    %c11_22 = arith.constant 11 : index
    %79 = arith.index_cast %1 : i32 to index
    %c0_23 = arith.constant 0 : index
    %80 = vector.load %arg2[%c11_22, %79, %c0_23] : memref<12x16x32xf32, #tpu.memory_space<vmem>>, vector<1x16x32xf32>
    %81 = vector.shape_cast %80 : vector<1x16x32xf32> to vector<16x32xf32>
    %82 = vector.broadcast %78 : f32 to vector<16x32xf32>
    %83 = arith.mulf %82, %81 : vector<16x32xf32>
    %84 = arith.addf %77, %83 : vector<16x32xf32>
    %85 = arith.index_cast %1 : i32 to index
    %c0_24 = arith.constant 0 : index
    %86 = vector.load %arg3[%85, %c0_24] : memref<16x32xf32, #tpu.memory_space<vmem>>, vector<16x32xf32>
    tpu.vector_store %arg3[%85, %c0_24], %84 {strides = array<i32>} : memref<16x32xf32, #tpu.memory_space<vmem>>, vector<16x32xf32>,
    %c1_i32 = arith.constant 1 : i32
    return
  }
  func.func @transform_0(%arg0: i32) -> i32 {
    %c0_i32 = arith.constant 0 : i32
    %c0_i32_0 = arith.constant 0 : i32
    return %c0_i32 : i32
  }
  func.func @transform_1(%arg0: i32) -> (i32, i32, i32) {
    %c0_i32 = arith.constant 0 : i32
    %c0_i32_0 = arith.constant 0 : i32
    %c0_i32_1 = arith.constant 0 : i32
    return %c0_i32, %arg0, %c0_i32_0 : i32, i32, i32
  }
  func.func @transform_2(%arg0: i32) -> (i32, i32) {
    %c0_i32 = arith.constant 0 : i32
    %c0_i32_0 = arith.constant 0 : i32
    return %arg0, %c0_i32 : i32, i32
  }
}

</mosaic_0001>

<llo_original>
// kernel: tpu_custom_call.1
$region0: #{tpu_custom_call.1}
  #allocation0 [shape = 'u32[]', space=smem, size = 0x4, offset = 0x4, fixed_abs, tag = 'smem constant byte address 0x4 - core index']
  #allocation1 [shape = 'u32[72,128]{1,0:T(1,128)}', space=vmem, size = 0x9000, scoped, tag = 'internal scratch']
  %s0 = inlined_call_operand.hbm [shape: f32[12], index: 0, kind: input, shape index: {}]
  %s1 = inlined_call_operand.hbm [shape: f32[12,16,32], index: 1, kind: input, shape index: {}]
  %s2 = inlined_call_operand.hbm [shape: f32[16,32], index: 2, kind: output, shape index: {}]
  %s3 = sld [smem:[#allocation0]]
  $region26: #{tpu_custom_call.1} parent=0
    _
  %s5 = ssub.s32 1, %s3
  %s6 = scalar_select 0, %s5, %s3
  $region1: #{tpu_custom_call.1} parent=0
    #allocation2 [shape = 'u8[512]{0}', space=smem, size = 0x200, scoped, tag = 'input window, operand 0, single buffered']
    #allocation3 [shape = 's32[1]{0}', space=sflag, size = 0x4, scoped, tag = 'scoped memory for tpu_custom_call.1']
    #allocation4 [shape = 's32[1]{0}', space=sflag, size = 0x4, scoped, tag = 'scoped memory for tpu_custom_call.1']
    #allocation5 [shape = 's32[1]{0}', space=sflag, size = 0x4, scoped, tag = 'scoped memory for tpu_custom_call.1']
    #allocation6 [shape = 'u8[98304]{0}', space=vmem, size = 0x18000, scoped, tag = 'input window, operand 1, single buffered']
    #allocation7 [shape = 'u8[8192]{0}', space=vmem, size = 0x2000, scoped, tag = 'output window, operand 0, single buffered']
    %7 = vsyncpa [#allocation5], 0
    %8 = vsyncpa [#allocation3], 0
    %9 = vsyncpa [#allocation4], 0
    // Predicated region
    $region2: #{tpu_custom_call.1} parent=1 // pred_check
      _
    $region3: #{tpu_custom_call.1} parent=1 // pred_check_branch
      %11 = sbr.rel (0) target = $region5
    $region4: #{tpu_custom_call.1} parent=1 // pred_region
      %13 = vsyncadd [#allocation5], 0
      %s15 = sshll.u32 %s0, 4
      %s16 = int_to_ptr.hbm [resolvable:$true] %s15
      %18 = dma.hbm_to_smem %s16, 16, [#allocation2], [#allocation5]
    $region5: #{tpu_custom_call.1} parent=1 // pred_fallthru
      _
    // Predicated region
    $region6: #{tpu_custom_call.1} parent=1 // pred_check
      _
    $region7: #{tpu_custom_call.1} parent=1 // pred_check_branch
      %20 = sbr.rel (0) target = $region9
    $region8: #{tpu_custom_call.1} parent=1 // pred_region
      %22 = vsyncadd [#allocation3], 0
      %s23 = sshll.u32 %s1, 4
      %s24 = int_to_ptr.hbm [resolvable:$true] %s23
      %s25 = sshll.u32 [#allocation6], 4
      %s26 = int_to_ptr.vmem [resolvable:$true] %s25
      %31 = dma.hbm_to_vmem [thread:$0]  %s24, 3072, %s26, [#allocation3], 128, 128, 8
    $region9: #{tpu_custom_call.1} parent=1 // pred_fallthru
      _
    // Predicated region
    $region10: #{tpu_custom_call.1} parent=1 // pred_check
      _
    $region11: #{tpu_custom_call.1} parent=1 // pred_check_branch
      %33 = sbr.rel (0) target = $region13
    $region12: #{tpu_custom_call.1} parent=1 // pred_region
      %35 = dma.done [#allocation5], 16
    $region13: #{tpu_custom_call.1} parent=1 // pred_fallthru
      _
    // Predicated region
    $region14: #{tpu_custom_call.1} parent=1 // pred_check
      _
    $region15: #{tpu_custom_call.1} parent=1 // pred_check_branch
      %37 = sbr.rel (0) target = $region17
    $region16: #{tpu_custom_call.1} parent=1 // pred_region
      %39 = dma.done [#allocation3], 3072
    $region17: #{tpu_custom_call.1} parent=1 // pred_fallthru
      _
    %40 = sfence
    %s41 = sld [smem:[#allocation2]]
    %v42 = vld [vmem:[#allocation6] sm:$0xff]
    %v43 = vld [vmem:[#allocation6 + $0x8] sm:$0xff]
    %v44 = vstv %s41
    %v45 = vmul.f32 %v44, %v42
    %v46 = vmul.f32 %v44, %v43
    %s47 = sld [smem:[#allocation2 + $0x1]]
    %s48 = sadd.s32 0, 16
    %s49 = scalar_lea.vmem [#allocation6], %s48
    %v50 = vld [vmem:[%s49] sm:$0xff]
    %v51 = vld [vmem:[%s49 + $0x8] sm:$0xff]
    %v52 = vstv %s47
    %v53 = vmul.f32 %v52, %v50
    %v54 = vmul.f32 %v52, %v51
    %v55 = vadd.f32 %v45, %v53
    %v56 = vadd.f32 %v46, %v54
    %s57 = sld [smem:[#allocation2 + $0x2]]
    %s58 = sadd.s32 0, 32
    %s59 = scalar_lea.vmem [#allocation6], %s58
    %v60 = vld [vmem:[%s59] sm:$0xff]
    %v61 = vld [vmem:[%s59 + $0x8] sm:$0xff]
    %v62 = vstv %s57
    %v63 = vmul.f32 %v62, %v60
    %v64 = vmul.f32 %v62, %v61
    %v65 = vadd.f32 %v55, %v63
    %v66 = vadd.f32 %v56, %v64
    %s67 = sld [smem:[#allocation2 + $0x3]]
    %s68 = sadd.s32 0, 48
    %s69 = scalar_lea.vmem [#allocation6], %s68
    %v70 = vld [vmem:[%s69] sm:$0xff]
    %v71 = vld [vmem:[%s69 + $0x8] sm:$0xff]
    %v72 = vstv %s67
    %v73 = vmul.f32 %v72, %v70
    %v74 = vmul.f32 %v72, %v71
    %v75 = vadd.f32 %v65, %v73
    %v76 = vadd.f32 %v66, %v74
    %s77 = sld [smem:[#allocation2 + $0x4]]
    %s78 = sadd.s32 0, 64
    %s79 = scalar_lea.vmem [#allocation6], %s78
    %v80 = vld [vmem:[%s79] sm:$0xff]
    %v81 = vld [vmem:[%s79 + $0x8] sm:$0xff]
    %v82 = vstv %s77
    %v83 = vmul.f32 %v82, %v80
    %v84 = vmul.f32 %v82, %v81
    %v85 = vadd.f32 %v75, %v83
    %v86 = vadd.f32 %v76, %v84
    %s87 = sld [smem:[#allocation2 + $0x5]]
    %s88 = sadd.s32 0, 80
    %s89 = scalar_lea.vmem [#allocation6], %s88
    %v90 = vld [vmem:[%s89] sm:$0xff]
    %v91 = vld [vmem:[%s89 + $0x8] sm:$0xff]
    %v92 = vstv %s87
    %v93 = vmul.f32 %v92, %v90
    %v94 = vmul.f32 %v92, %v91
    %v95 = vadd.f32 %v85, %v93
    %v96 = vadd.f32 %v86, %v94
    %s97 = sld [smem:[#allocation2 + $0x6]]
    %s98 = sadd.s32 0, 96
    %s99 = scalar_lea.vmem [#allocation6], %s98
    %v100 = vld [vmem:[%s99] sm:$0xff]
    %v101 = vld [vmem:[%s99 + $0x8] sm:$0xff]
    %v102 = vstv %s97
    %v103 = vmul.f32 %v102, %v100
    %v104 = vmul.f32 %v102, %v101
    %v105 = vadd.f32 %v95, %v103
    %v106 = vadd.f32 %v96, %v104
    %s107 = sld [smem:[#allocation2 + $0x7]]
    %s108 = sadd.s32 0, 112
    %s109 = scalar_lea.vmem [#allocation6], %s108
    %v110 = vld [vmem:[%s109] sm:$0xff]
    %v111 = vld [vmem:[%s109 + $0x8] sm:$0xff]
    %v112 = vstv %s107
    %v113 = vmul.f32 %v112, %v110
    %v114 = vmul.f32 %v112, %v111
    %v115 = vadd.f32 %v105, %v113
    %v116 = vadd.f32 %v106, %v114
    %s117 = sld [smem:[#allocation2 + $0x8]]
    %s118 = sadd.s32 0, 128
    %s119 = scalar_lea.vmem [#allocation6], %s118
    %v120 = vld [vmem:[%s119] sm:$0xff]
    %v121 = vld [vmem:[%s119 + $0x8] sm:$0xff]
    %v122 = vstv %s117
    %v123 = vmul.f32 %v122, %v120
    %v124 = vmul.f32 %v122, %v121
    %v125 = vadd.f32 %v115, %v123
    %v126 = vadd.f32 %v116, %v124
    %s127 = sld [smem:[#allocation2 + $0x9]]
    %s128 = sadd.s32 0, 144
    %s129 = scalar_lea.vmem [#allocation6], %s128
    %v130 = vld [vmem:[%s129] sm:$0xff]
    %v131 = vld [vmem:[%s129 + $0x8] sm:$0xff]
    %v132 = vstv %s127
    %v133 = vmul.f32 %v132, %v130
    %v134 = vmul.f32 %v132, %v131
    %v135 = vadd.f32 %v125, %v133
    %v136 = vadd.f32 %v126, %v134
    %s137 = sld [smem:[#allocation2 + $0xa]]
    %s138 = sadd.s32 0, 160
    %s139 = scalar_lea.vmem [#allocation6], %s138
    %v140 = vld [vmem:[%s139] sm:$0xff]
    %v141 = vld [vmem:[%s139 + $0x8] sm:$0xff]
    %v142 = vstv %s137
    %v143 = vmul.f32 %v142, %v140
    %v144 = vmul.f32 %v142, %v141
    %v145 = vadd.f32 %v135, %v143
    %v146 = vadd.f32 %v136, %v144
    %s147 = sld [smem:[#allocation2 + $0xb]]
    %s148 = sadd.s32 0, 176
    %s149 = scalar_lea.vmem [#allocation6], %s148
    %v150 = vld [vmem:[%s149] sm:$0xff]
    %v151 = vld [vmem:[%s149 + $0x8] sm:$0xff]
    %v152 = vstv %s147
    %v153 = vmul.f32 %v152, %v150
    %v154 = vmul.f32 %v152, %v151
    %v155 = vadd.f32 %v145, %v153
    %v156 = vadd.f32 %v146, %v154
    %vm157 = vcmask 261120
    %158 = vst.msk [vmem:[#allocation7] sm:$0xff] %vm157, %v155
    %159 = vst.msk [vmem:[#allocation7 + $0x8] sm:$0xff] %vm157, %v156
    // Predicated region
    $region18: #{tpu_custom_call.1} parent=1 // pred_check
      _
    $region19: #{tpu_custom_call.1} parent=1 // pred_check_branch
      %161 = sbr.rel (0) target = $region21
    $region20: #{tpu_custom_call.1} parent=1 // pred_region
      %163 = vsyncadd [#allocation4], 0
      %s164 = sshll.u32 [#allocation7], 4
      %s165 = int_to_ptr.vmem [resolvable:$true] %s164
      %s166 = sshll.u32 %s2, 4
      %s167 = int_to_ptr.hbm [resolvable:$true] %s166
      %172 = dma.vmem_to_hbm [thread:$0]  %s165, 256, %s167, [#allocation4], 128, 128, 8
    $region21: #{tpu_custom_call.1} parent=1 // pred_fallthru
      _
    // Predicated region
    $region22: #{tpu_custom_call.1} parent=1 // pred_check
      _
    $region23: #{tpu_custom_call.1} parent=1 // pred_check_branch
      %174 = sbr.rel (0) target = $region25
    $region24: #{tpu_custom_call.1} parent=1 // pred_region
      %176 = dma.done [#allocation4], 256
    $region25: #{tpu_custom_call.1} parent=1 // pred_fallthru
      _
    %177 = vsyncpa [#allocation3], 1
    %178 = vsyncpa [#allocation4], 1
    %179 = vsyncpa [#allocation5], 1

</llo_original>
